<compile_context>
chip_gen: v6e
topology: v6e:2x2x1
jax: 0.10.0
libtpu: 0.0.40
codegen_flags: <defaults>
</compile_context>

<pallas_src>
import math
from functools import partial

import jax
import jax.numpy as jnp
from jax.experimental import pallas as pl
from jax.experimental.pallas import tpu as pltpu

LANES = 128
# ~3 MiB per tile; in+out, each double-buffered -> ~12 MiB VMEM total.
# Safe under v5e's 16 MiB default scoped VMEM and v6e/v7x's 32 MiB defaults.
TARGET_TILE_BYTES = 3 * 1024 * 1024


def _mish_kernel(x_ref, o_ref, *, has_upper, upper):
    x = x_ref[...].astype(jnp.float32)
    # tanh(softplus(x)) with a single exp:
    #   t = 1 + e^x ;  tanh(log t) = (t^2 - 1)/(t^2 + 1) = 1 - 2/(1 + t^2)
    e = jnp.exp(x)
    t = 1.0 + e
    tsp = 1.0 - 2.0 / (1.0 + t * t)       # exact divide keeps ~1e-7 rel error
    # For x > 20, tanh(softplus(x)) == 1.0 in f32 (also guards e^x overflow path).
    tsp = jnp.where(x > 20.0, 1.0, tsp)
    y = x * tsp
    # F.hardtanh(y, min_val=-1.0, max_val=upper_bound)
    y = jnp.maximum(y, -1.0)
    if has_upper:                         # static (trace-time) decision
        y = jnp.minimum(y, upper)
    o_ref[...] = y.astype(o_ref.dtype)


def _sublane_granule(itemsize):
    # Native packed tiling: (8,128) f32, (16,128) bf16, (32,128) int8/fp8.
    return 8 * max(1, 4 // itemsize)


def mish(x, upper_bound=math.inf):
    """Elementwise Mish + hardtanh(min=-1, max=upper_bound), any shape/dtype."""
    orig_shape = x.shape
    orig_dtype = x.dtype
    n = x.size
    itemsize = jnp.dtype(orig_dtype).itemsize
    granule = _sublane_granule(itemsize)
    target_elems = max(granule * LANES, TARGET_TILE_BYTES // itemsize)

    has_upper = math.isfinite(float(upper_bound))
    kernel = partial(_mish_kernel, has_upper=has_upper, upper=float(upper_bound))

    cost = pl.CostEstimate(
        flops=7 * n,
        transcendentals=2 * n,            # exp + reciprocal per element
        bytes_accessed=2 * n * itemsize,
    )
    cparams = pltpu.CompilerParams(dimension_semantics=("parallel",))

    flat = x.reshape(-1)

    if n % LANES == 0:
        # Lane-aligned: lane-dense 2-D slab, never any padding copy.
        width = LANES
        for w in (4096, 2048, 1024, 512, 256):
            if n % w == 0:
                width = w
                break
        rows = n // width
        block_rows = min(rows, max(granule, target_elems // width))
        # Prefer >= 2 grid steps so v7x's two TensorCores both get work.
        if rows > granule:
            half = ((rows + 1) // 2 + granule - 1) // granule * granule
            block_rows = min(block_rows, half)
        if block_rows < rows:
            block_rows = max(granule, block_rows - block_rows % granule)

        slab = flat.reshape(rows, width)
        out = pl.pallas_call(
            kernel,
            out_shape=jax.ShapeDtypeStruct((rows, width), orig_dtype),
            grid_spec=pltpu.PrefetchScalarGridSpec(
                num_scalar_prefetch=0,
                grid=(pl.cdiv(rows, block_rows),),
                in_specs=[pl.BlockSpec((block_rows, width), lambda i: (i, 0))],
                out_specs=pl.BlockSpec((block_rows, width), lambda i: (i, 0)),
            ),
            compiler_params=cparams,
            cost_estimate=cost,
        )(slab)
    else:
        # Ragged element count: single-pass (1, n) kernel blocked along lanes.
        # Pallas masks the partial tail block, so there is no pad/slice HBM
        # round trip.  (Sublane utilization is lower here, but this path only
        # triggers for element counts not divisible by 128.)
        block_cols = max(LANES, target_elems - target_elems % LANES)
        if block_cols >= n:
            block_cols = n                # single block equal to full array dim
        slab = flat.reshape(1, n)
        out = pl.pallas_call(
            kernel,
            out_shape=jax.ShapeDtypeStruct((1, n), orig_dtype),
            grid_spec=pltpu.PrefetchScalarGridSpec(
                num_scalar_prefetch=0,
                grid=(pl.cdiv(n, block_cols),),
                in_specs=[pl.BlockSpec((1, block_cols), lambda i: (0, i))],
                out_specs=pl.BlockSpec((1, block_cols), lambda i: (0, i)),
            ),
            compiler_params=cparams,
            cost_estimate=cost,
        )(slab)

    return out.reshape(orig_shape)


def _mish_ref(x, upper_bound=math.inf):
    x32 = x.astype(jnp.float32)
    y = x32 * jnp.tanh(jnp.logaddexp(x32, 0.0))
    y = jnp.clip(y, -1.0, upper_bound)
    return y.astype(x.dtype)


if __name__ == "__main__":
    key = jax.random.PRNGKey(0)
    k1, k2, k3 = jax.random.split(key, 3)

    # Small NCHW input consistent with typical conv-activation usage.
    x = jax.random.normal(k1, (2, 4, 16, 16), dtype=jnp.float32) * 3.0
    # Ragged-size input (element count not a multiple of 128).
    x_odd = jax.random.normal(k2, (3, 5, 7, 11), dtype=jnp.float32) * 3.0
    # Multi-step-grid + partial-row-block case.
    x_multi = jax.random.normal(k3, (2, 8, 28, 28), dtype=jnp.float32) * 3.0
    # bf16 input to exercise dtype-aware tiling.
    x_bf16 = x.astype(jnp.bfloat16)

    # Default module config: upper_bound = inf.
    y = mish(x)
    jax.block_until_ready(y)
    # Finite upper bound (as the module allows).
    y_bounded = mish(x, upper_bound=0.5)
    jax.block_until_ready(y_bounded)
    # Ragged path.
    y_odd = mish(x_odd)
    jax.block_until_ready(y_odd)
    # Multi-block path.
    y_multi = mish(x_multi)
    jax.block_until_ready(y_multi)
    # bf16 path.
    y_bf16 = mish(x_bf16)
    jax.block_until_ready(y_bf16)

    # Correctness checks against pure-JAX reference.
    assert y.shape == x.shape and y.dtype == x.dtype
    assert jnp.allclose(y, _mish_ref(x), rtol=1e-5, atol=1e-5)
    assert jnp.allclose(y_bounded, _mish_ref(x, upper_bound=0.5), rtol=1e-5, atol=1e-5)
    assert jnp.allclose(y_odd, _mish_ref(x_odd), rtol=1e-5, atol=1e-5)
    assert jnp.allclose(y_multi, _mish_ref(x_multi), rtol=1e-5, atol=1e-5)
    assert y_bf16.dtype == jnp.bfloat16
    assert jnp.allclose(y_bf16.astype(jnp.float32),
                        _mish_ref(x_bf16).astype(jnp.float32),
                        rtol=1e-2, atol=1e-2)

    print("KERNEL_OK")
</pallas_src>

<mosaic_0001>
module attributes {stable_mosaic.version = 11 : i64} {
  func.func @_mish_kernel(%arg0: i32, %arg1: memref<1x2048xf32, #tpu.memory_space<vmem>>, %arg2: memref<1x2048xf32, #tpu.memory_space<vmem>>) attributes {dimension_semantics = [#tpu.dimension_semantics<parallel>], iteration_bounds = array<i64: 1>, scalar_prefetch = 0 : i64, scratch_operands = 0 : i64, tpu.core_type = #tpu.core_type<tc>, window_params = [{transform_indices = @transform_0, window_bounds = array<i64: 1, 2048>}, {transform_indices = @transform_1, window_bounds = array<i64: 1, 2048>}]} {
    %c0 = arith.constant 0 : index
    %c0_0 = arith.constant 0 : index
    %0 = vector.load %arg1[%c0, %c0_0] : memref<1x2048xf32, #tpu.memory_space<vmem>>, vector<1x2048xf32>
    %1 = math.exp %0 : vector<1x2048xf32>
    %cst = arith.constant 1.000000e+00 : f32
    %2 = vector.broadcast %cst : f32 to vector<1x2048xf32>
    %3 = arith.addf %2, %1 : vector<1x2048xf32>
    %4 = arith.mulf %3, %3 : vector<1x2048xf32>
    %cst_1 = arith.constant 1.000000e+00 : f32
    %5 = vector.broadcast %cst_1 : f32 to vector<1x2048xf32>
    %6 = arith.addf %5, %4 : vector<1x2048xf32>
    %cst_2 = arith.constant 2.000000e+00 : f32
    %7 = vector.broadcast %cst_2 : f32 to vector<1x2048xf32>
    %8 = arith.divf %7, %6 : vector<1x2048xf32>
    %cst_3 = arith.constant 1.000000e+00 : f32
    %9 = vector.broadcast %cst_3 : f32 to vector<1x2048xf32>
    %10 = arith.subf %9, %8 : vector<1x2048xf32>
    %cst_4 = arith.constant 2.000000e+01 : f32
    %11 = vector.broadcast %cst_4 : f32 to vector<1x2048xf32>
    %12 = arith.cmpf ogt, %0, %11 : vector<1x2048xf32>
    %cst_5 = arith.constant 1.000000e+00 : f32
    %13 = vector.broadcast %cst_5 : f32 to vector<1x2048xf32>
    %14 = arith.select %12, %13, %10 : vector<1x2048xi1>, vector<1x2048xf32>
    %15 = arith.mulf %0, %14 : vector<1x2048xf32>
    %cst_6 = arith.constant -1.000000e+00 : f32
    %16 = vector.broadcast %cst_6 : f32 to vector<1x2048xf32>
    %17 = arith.maximumf %15, %16 : vector<1x2048xf32>
    %c0_7 = arith.constant 0 : index
    %c0_8 = arith.constant 0 : index
    %18 = vector.load %arg2[%c0_7, %c0_8] : memref<1x2048xf32, #tpu.memory_space<vmem>>, vector<1x2048xf32>
    tpu.vector_store %arg2[%c0_7, %c0_8], %17 {strides = array<i32>} : memref<1x2048xf32, #tpu.memory_space<vmem>>, vector<1x2048xf32>,
    return
  }
  func.func @transform_0(%arg0: i32) -> (i32, i32) {
    %c0_i32 = arith.constant 0 : i32
    %c0_i32_0 = arith.constant 0 : i32
    return %arg0, %c0_i32 : i32, i32
  }
  func.func @transform_1(%arg0: i32) -> (i32, i32) {
    %c0_i32 = arith.constant 0 : i32
    %c0_i32_0 = arith.constant 0 : i32
    return %arg0, %c0_i32 : i32, i32
  }
}

</mosaic_0001>

<llo_original>
// kernel: tpu_custom_call.1
$region0: #{tpu_custom_call.1}
  #allocation0 [shape = 'u32[]', space=smem, size = 0x4, offset = 0x4, fixed_abs, tag = 'smem constant byte address 0x4 - core index']
  #allocation1 [shape = 'u32[144,128]{1,0:T(1,128)}', space=vmem, size = 0x12000, scoped, tag = 'internal scratch']
  %s0 = inlined_call_operand.hbm [shape: f32[1,2048], index: 0, kind: input, shape index: {}]
  %s1 = inlined_call_operand.hbm [shape: f32[1,2048], index: 1, kind: output, shape index: {}]
  %s2 = sld [smem:[#allocation0]]
  $region18: #{tpu_custom_call.1} parent=0
    _
  %s4 = ssub.s32 1, %s2
  %s5 = scalar_select 0, %s4, %s2
  $region1: #{tpu_custom_call.1} parent=0
    #allocation2 [shape = 'u8[8192]{0}', space=vmem, size = 0x2000, scoped, tag = 'input window, operand 0, single buffered']
    #allocation3 [shape = 's32[1]{0}', space=sflag, size = 0x4, scoped, tag = 'scoped memory for tpu_custom_call.1']
    #allocation4 [shape = 's32[1]{0}', space=sflag, size = 0x4, scoped, tag = 'scoped memory for tpu_custom_call.1']
    #allocation5 [shape = 'u8[8192]{0}', space=vmem, size = 0x2000, scoped, tag = 'output window, operand 0, single buffered']
    %6 = vsyncpa [#allocation3], 0
    %7 = vsyncpa [#allocation4], 0
    // Predicated region
    $region2: #{tpu_custom_call.1} parent=1 // pred_check
      _
    $region3: #{tpu_custom_call.1} parent=1 // pred_check_branch
      %9 = sbr.rel (0) target = $region5
    $region4: #{tpu_custom_call.1} parent=1 // pred_region
      %s11 = ssub.s32 256, 256
      %12 = vsyncadd [#allocation3], %s11
      %s14 = sshll.u32 [#allocation2], 4
      %s15 = int_to_ptr.vmem [resolvable:$true] %s14
      %17 = dma.hbm_to_vmem [thread:$0]  %s0, 256, %s15, [#allocation3]
    $region5: #{tpu_custom_call.1} parent=1 // pred_fallthru
      _
    // Predicated region
    $region6: #{tpu_custom_call.1} parent=1 // pred_check
      _
    $region7: #{tpu_custom_call.1} parent=1 // pred_check_branch
      %19 = sbr.rel (0) target = $region9
    $region8: #{tpu_custom_call.1} parent=1 // pred_region
      %20 = dma.done [#allocation3], 256
    $region9: #{tpu_custom_call.1} parent=1 // pred_fallthru
      _
    %v21 = vld [vmem:[#allocation2] sm:$0xff]
    %v22 = vld [vmem:[#allocation2 + $0x8] sm:$0xff]
    %v23 = vmul.f32 %v21, 1.442695
    %v24 = vpow.pop %v23
    %v25 = vmul.f32 %v22, 1.442695
    %v26 = vpow.pop %v25
    %v27 = vadd.f32 %v24, 1.0
    %v28 = vadd.f32 %v26, 1.0
    %v29 = vmul.f32 %v27, %v27
    %v30 = vmul.f32 %v28, %v28
    %v31 = vadd.f32 %v29, 1.0
    %v32 = vadd.f32 %v30, 1.0
    %v33 = vrcp.pop %v31
    %v34 = vmul.f32 2.0, %v33
    %v35 = vrcp.pop %v32
    %v36 = vmul.f32 2.0, %v35
    %v37 = vsub.f32 1.0, %v34
    %v38 = vsub.f32 1.0, %v36
    %vm39 = vcmp.gt.f32.partialorder %v21, 20.0
    %vm40 = vcmp.gt.f32.partialorder %v22, 20.0
    %v41 = vsel %vm39, 1.0, %v37
    %v42 = vsel %vm40, 1.0, %v38
    %v43 = vmul.f32 %v21, %v41
    %v44 = vmul.f32 %v22, %v42
    %v45 = vmax.f32 %v43, -1.0
    %v46 = vmax.f32 %v44, -1.0
    %47 = vst [vmem:[#allocation5] sm:$0xff] %v45
    %48 = vst [vmem:[#allocation5 + $0x8] sm:$0xff] %v46
    // Predicated region
    $region10: #{tpu_custom_call.1} parent=1 // pred_check
      _
    $region11: #{tpu_custom_call.1} parent=1 // pred_check_branch
      %50 = sbr.rel (0) target = $region13
    $region12: #{tpu_custom_call.1} parent=1 // pred_region
      %s52 = ssub.s32 256, 256
      %53 = vsyncadd [#allocation4], %s52
      %s55 = sshll.u32 [#allocation5], 4
      %s56 = int_to_ptr.vmem [resolvable:$true] %s55
      %58 = dma.vmem_to_hbm [thread:$0]  %s56, 256, %s1, [#allocation4]
    $region13: #{tpu_custom_call.1} parent=1 // pred_fallthru
      _
    // Predicated region
    $region14: #{tpu_custom_call.1} parent=1 // pred_check
      _
    $region15: #{tpu_custom_call.1} parent=1 // pred_check_branch
      %60 = sbr.rel (0) target = $region17
    $region16: #{tpu_custom_call.1} parent=1 // pred_region
      %61 = dma.done [#allocation4], 256
    $region17: #{tpu_custom_call.1} parent=1 // pred_fallthru
      _
    %62 = vsyncpa [#allocation3], 1
    %63 = vsyncpa [#allocation4], 1

</llo_original>
